<compile_context>
chip_gen: v7x
topology: tpu7x:2x2x1
jax: 0.10.0
libtpu: 0.0.40
codegen_flags: <defaults>
</compile_context>

<pallas_src>
import functools

import jax
import jax.numpy as jnp
from jax import lax
from jax.experimental import pallas as pl
from jax.experimental.pallas import tpu as pltpu


def _fused_kernel(uid_ref, aid_ref, t_ref, o_ref, *, num_user):
    # uid_ref, aid_ref : (1, tb)     int32  -- batch on lanes
    # t_ref            : (2D, U+A)   f32/bf16 -- block-diagonal stacked,
    #                    transposed tables: [:D, :U] = user_table.T,
    #                    [D:, U:] = ad_table.T, zeros elsewhere.
    # o_ref            : (2, tb)     float32 -- row 0 = 1-p, row 1 = p
    uid = uid_ref[...]                                    # (1, tb)
    aid = aid_ref[...]                                    # (1, tb)
    two_d, ua = t_ref.shape
    dim = two_d // 2
    tb = uid.shape[1]

    # One combined one-hot for both gathers.  Rows [0, U) can only match uid,
    # rows [U, U+A) can only match aid + U, so a single OR of two compares on
    # one iota is an exact block-diagonal selector.
    row = lax.broadcasted_iota(jnp.int32, (ua, tb), 0)
    hit = (row == uid) | (row == (aid + num_user))
    dt = t_ref.dtype
    oh = jnp.where(hit, jnp.ones((), dt), jnp.zeros((), dt))          # (U+A, tb)

    # Single MXU matmul gathers both embeddings: rows [0:D] = user, [D:2D] = ad.
    # Exact gather: every output element is one table value plus exact zeros.
    emb = jnp.dot(t_ref[...], oh, preferred_element_type=jnp.float32)  # (2D, tb)
    u_emb = emb[:dim, :]
    a_emb = emb[dim:, :]

    # Dot over D (cheap sublane reduce), then both sigmoids in one EUP op and a
    # single unmasked full-tile store.
    dot = jnp.sum(u_emb * a_emb, axis=0, keepdims=True)               # (1, tb)
    scores = jnp.concatenate([-dot, dot], axis=0)                     # (2, tb)
    o_ref[...] = jax.nn.sigmoid(scores).astype(o_ref.dtype)


def embedding_dot_product(user_ids, ad_ids, user_table, ad_table, *,
                          tb=None, table_dtype=jnp.float32,
                          transposed_output=False):
    """Fused embedding-gather + dot + sigmoid.

    Returns (B, 2) float32 ([1-p, p]) by default, or the kernel-native (2, B)
    layout if transposed_output=True (skips one HBM round trip).
    table_dtype=jnp.bfloat16 enables the bf16 MXU fast path on v6e/v7x (table
    values round to bf16; the gather itself stays exact).
    """
    B = user_ids.shape[0]
    U, D = user_table.shape
    A, D2 = ad_table.shape
    assert D == D2, "user/ad embedding dims must match"

    # Adaptive lane-dense batch tile: big enough to amortize ~0.35us/step grid
    # overhead, small enough to limit padded-lane waste and keep >=2 grid
    # steps (v7x has 2 TensorCores sharded over "parallel" grid axes).
    if tb is None:
        tb = min(max(pl.next_power_of_2(pl.cdiv(B, 8)), 128), 8192)
    B_pad = pl.cdiv(B, tb) * tb

    # Batch on the lane axis.  Pad (with valid index 0) only when needed.
    uid = user_ids.astype(jnp.int32).reshape(1, B)
    aid = ad_ids.astype(jnp.int32).reshape(1, B)
    if B_pad != B:
        uid = jnp.pad(uid, ((0, 0), (0, B_pad - B)))
        aid = jnp.pad(aid, ((0, 0), (0, B_pad - B)))

    # Block-diagonal stacked, transposed tables: (2D, U+A).  Layout plumbing
    # done once in the wrapper; the whole operand (a few KiB) rides in VMEM.
    stacked = jnp.zeros((2 * D, U + A), table_dtype)
    stacked = stacked.at[:D, :U].set(user_table.astype(table_dtype).T)
    stacked = stacked.at[D:, U:].set(ad_table.astype(table_dtype).T)

    kernel = functools.partial(_fused_kernel, num_user=U)

    out_t = pl.pallas_call(
        kernel,
        out_shape=jax.ShapeDtypeStruct((2, B_pad), jnp.float32),
        grid_spec=pltpu.PrefetchScalarGridSpec(
            num_scalar_prefetch=0,
            grid=(B_pad // tb,),
            in_specs=[
                pl.BlockSpec((1, tb), lambda i: (0, i)),         # user ids (lanes)
                pl.BlockSpec((1, tb), lambda i: (0, i)),         # ad ids   (lanes)
                pl.BlockSpec((2 * D, U + A), lambda i: (0, 0)),  # stacked table (whole array)
            ],
            out_specs=pl.BlockSpec((2, tb), lambda i: (0, i)),
        ),
        compiler_params=pltpu.CompilerParams(
            dimension_semantics=("parallel",),
            vmem_limit_bytes=32 * 1024 * 1024,
        ),
    )(uid, aid, stacked)

    if B_pad != B:
        out_t = out_t[:, :B]
    if transposed_output:
        return out_t            # (2, B): row 0 = 1-p, row 1 = p
    return out_t.T              # (B, 2), matches the PyTorch module


if __name__ == "__main__":
    # Synthetic, deterministic parameters (nn.Embedding weight shapes).
    user_length = 50
    ad_length = 40
    embedding_dim = 32
    batch = 8

    key = jax.random.PRNGKey(0)
    k_u, k_a, k_uid, k_aid = jax.random.split(key, 4)

    user_table = jax.random.normal(k_u, (user_length, embedding_dim), jnp.float32)
    ad_table = jax.random.normal(k_a, (ad_length, embedding_dim), jnp.float32)

    user_ids = jax.random.randint(k_uid, (batch,), 0, user_length, jnp.int32)
    ad_ids = jax.random.randint(k_aid, (batch,), 0, ad_length, jnp.int32)

    # Pure-JAX reference.
    u_emb = user_table[user_ids]
    a_emb = ad_table[ad_ids]
    p_ref = jax.nn.sigmoid(jnp.sum(u_emb * a_emb, axis=1))
    ref = jnp.stack([1.0 - p_ref, p_ref], axis=1)

    # Exact f32 path (matches PyTorch numerics).
    out = embedding_dot_product(user_ids, ad_ids, user_table, ad_table)
    out = jax.block_until_ready(out)
    assert out.shape == (batch, 2) and out.dtype == jnp.float32
    assert jnp.allclose(out, ref, atol=1e-5, rtol=1e-5)

    # bf16 fast path (v6e/v7x): table values rounded to bf16, gather exact.
    out_bf16 = embedding_dot_product(user_ids, ad_ids, user_table, ad_table,
                                     table_dtype=jnp.bfloat16)
    out_bf16 = jax.block_until_ready(out_bf16)
    assert out_bf16.shape == (batch, 2) and out_bf16.dtype == jnp.float32
    assert jnp.allclose(out_bf16, ref, atol=5e-2, rtol=5e-2)

    print("KERNEL_OK")
</pallas_src>

<mosaic_0001>
module attributes {stable_mosaic.version = 11 : i64} {
  func.func @_fused_kernel(%arg0: i32, %arg1: memref<1x128xi32, #tpu.memory_space<vmem>>, %arg2: memref<1x128xi32, #tpu.memory_space<vmem>>, %arg3: memref<64x90xf32, #tpu.memory_space<vmem>>, %arg4: memref<2x128xf32, #tpu.memory_space<vmem>>) attributes {dimension_semantics = [#tpu.dimension_semantics<parallel>], iteration_bounds = array<i64: 1>, scalar_prefetch = 0 : i64, scratch_operands = 0 : i64, tpu.core_type = #tpu.core_type<tc>, window_params = [{transform_indices = @transform_0, window_bounds = array<i64: 1, 128>}, {transform_indices = @transform_1, window_bounds = array<i64: 1, 128>}, {pipeline_mode = #tpu.pipeline_mode<synchronous>, transform_indices = @transform_2, window_bounds = array<i64: 64, 90>}, {transform_indices = @transform_3, window_bounds = array<i64: 2, 128>}]} {
    %c0 = arith.constant 0 : index
    %c0_0 = arith.constant 0 : index
    %0 = vector.load %arg1[%c0, %c0_0] : memref<1x128xi32, #tpu.memory_space<vmem>>, vector<1x128xi32>
    %c0_1 = arith.constant 0 : index
    %c0_2 = arith.constant 0 : index
    %1 = vector.load %arg2[%c0_1, %c0_2] : memref<1x128xi32, #tpu.memory_space<vmem>>, vector<1x128xi32>
    %2 = tpu.iota {dimensions = array<i32: 0>} : vector<90x128xi32>
    %3 = vector.broadcast %0 : vector<1x128xi32> to vector<90x128xi32>
    %4 = arith.cmpi eq, %2, %3 : vector<90x128xi32>
    %c50_i32 = arith.constant 50 : i32
    %5 = vector.broadcast %c50_i32 : i32 to vector<1x128xi32>
    %6 = arith.addi %1, %5 : vector<1x128xi32>
    %7 = vector.broadcast %6 : vector<1x128xi32> to vector<90x128xi32>
    %8 = arith.cmpi eq, %2, %7 : vector<90x128xi32>
    %9 = arith.ori %4, %8 : vector<90x128xi1>
    %cst = arith.constant 1.000000e+00 : f32
    %cst_3 = arith.constant 0.000000e+00 : f32
    %10 = vector.broadcast %cst : f32 to vector<90x128xf32>
    %11 = vector.broadcast %cst_3 : f32 to vector<90x128xf32>
    %12 = arith.select %9, %10, %11 : vector<90x128xi1>, vector<90x128xf32>
    %c0_4 = arith.constant 0 : index
    %c0_5 = arith.constant 0 : index
    %13 = vector.load %arg3[%c0_4, %c0_5] : memref<64x90xf32, #tpu.memory_space<vmem>>, vector<64x90xf32>
    %cst_6 = arith.constant dense<0.000000e+00> : vector<64x128xf32>
    %14 = tpu.matmul %13, %12, %cst_6 {dimension_numbers = #tpu.dot_dimension_numbers<[1], [0], [0], [1], [0, 0, 1, 1], [], []>} : vector<64x90xf32>, vector<90x128xf32>, vector<64x128xf32> -> vector<64x128xf32>
    %15 = vector.extract_strided_slice %14 {offsets = [0, 0], sizes = [32, 128], strides = [1, 1]} : vector<64x128xf32> to vector<32x128xf32>
    %16 = vector.extract_strided_slice %14 {offsets = [32, 0], sizes = [32, 128], strides = [1, 1]} : vector<64x128xf32> to vector<32x128xf32>
    %17 = arith.mulf %15, %16 : vector<32x128xf32>
    %cst_7 = arith.constant dense<0.000000e+00> : vector<128xf32>
    %18 = vector.multi_reduction <add>, %17, %cst_7 [0] : vector<32x128xf32> to vector<128xf32>
    %19 = vector.shape_cast %18 : vector<128xf32> to vector<1x128xf32>
    %cst_8 = arith.constant 0.000000e+00 : f32
    %20 = vector.broadcast %cst_8 : f32 to vector<1x128xf32>
    %21 = arith.subf %20, %19 : vector<1x128xf32>
    %22 = tpu.concatenate %21, %19 in 0 : vector<1x128xf32>, vector<1x128xf32> -> vector<2x128xf32>
    %23 = arith.negf %22 : vector<2x128xf32>
    %24 = math.exp %23 : vector<2x128xf32>
    %cst_9 = arith.constant 1.000000e+00 : f32
    %25 = vector.broadcast %cst_9 : f32 to vector<2x128xf32>
    %26 = arith.addf %25, %24 : vector<2x128xf32>
    %27 = arith.divf %25, %26 : vector<2x128xf32>
    %c0_10 = arith.constant 0 : index
    %c0_11 = arith.constant 0 : index
    %28 = vector.load %arg4[%c0_10, %c0_11] : memref<2x128xf32, #tpu.memory_space<vmem>>, vector<2x128xf32>
    tpu.vector_store %arg4[%c0_10, %c0_11], %27 {strides = array<i32>} : memref<2x128xf32, #tpu.memory_space<vmem>>, vector<2x128xf32>,
    return
  }
  func.func @transform_0(%arg0: i32) -> (i32, i32) {
    %c0_i32 = arith.constant 0 : i32
    %c0_i32_0 = arith.constant 0 : i32
    return %c0_i32, %arg0 : i32, i32
  }
  func.func @transform_1(%arg0: i32) -> (i32, i32) {
    %c0_i32 = arith.constant 0 : i32
    %c0_i32_0 = arith.constant 0 : i32
    return %c0_i32, %arg0 : i32, i32
  }
  func.func @transform_2(%arg0: i32) -> (i32, i32) {
    %c0_i32 = arith.constant 0 : i32
    %c0_i32_0 = arith.constant 0 : i32
    %c0_i32_1 = arith.constant 0 : i32
    return %c0_i32, %c0_i32_0 : i32, i32
  }
  func.func @transform_3(%arg0: i32) -> (i32, i32) {
    %c0_i32 = arith.constant 0 : i32
    %c0_i32_0 = arith.constant 0 : i32
    return %c0_i32, %arg0 : i32, i32
  }
}

</mosaic_0001>

<llo_original>
// kernel: tpu_custom_call.1
$region0: #{tpu_custom_call.1}
  #allocation0 [shape = 'u32[]', space=smem, size = 0x4, offset = 0x4, fixed_abs, tag = 'smem constant byte address 0x4 - core index']
  #allocation1 [shape = 'u32[144,128]{1,0:T(1,128)}', space=vmem, size = 0x12000, scoped, tag = 'internal scratch']
  %s0 = inlined_call_operand.hbm [shape: s32[1,128], index: 0, kind: input, shape index: {}]
  %s1 = inlined_call_operand.vmem [shape: s32[1,128], index: 1, kind: input, shape index: {}]
  %s2 = inlined_call_operand.hbm [shape: f32[64,90], index: 2, kind: input, shape index: {}]
  %s3 = inlined_call_operand.hbm [shape: f32[2,128], index: 3, kind: output, shape index: {}]
  %s4 = sld [smem:[#allocation0]]
  $region30: #{tpu_custom_call.1} parent=0
    _
  %s6 = ssub.s32 1, %s4
  %s7 = scalar_select 0, %s6, %s4
  $region1: #{tpu_custom_call.1} parent=0
    #allocation2 [shape = 'u8[512]{0}', space=vmem, size = 0x400, scoped, tag = 'input window, operand 0, single buffered']
    #allocation3 [shape = 's32[1]{0}', space=sflag, size = 0x4, scoped, tag = 'scoped memory for tpu_custom_call.1']
    #allocation4 [shape = 's32[1]{0}', space=sflag, size = 0x4, scoped, tag = 'scoped memory for tpu_custom_call.1']
    #allocation5 [shape = 'u8[32768]{0}', space=vmem, size = 0x8000, scoped, tag = 'input window, operand 2, single buffered']
    #allocation6 [shape = 's32[1]{0}', space=sflag, size = 0x4, scoped, tag = 'scoped memory for tpu_custom_call.1']
    #allocation7 [shape = 'u8[1024]{0}', space=vmem, size = 0x400, scoped, tag = 'output window, operand 0, single buffered']
    %8 = vsyncpa [#allocation3], 0
    %9 = vsyncpa [#allocation6], 0
    %10 = vsyncpa [#allocation4], 0
    // Predicated region
    $region2: #{tpu_custom_call.1} parent=1 // pred_check
      _
    $region3: #{tpu_custom_call.1} parent=1 // pred_check_branch
      %12 = sbr.rel (0) target = $region5
    $region4: #{tpu_custom_call.1} parent=1 // pred_region
      %s14 = ssub.s32 16, 16
      %15 = vsyncadd [#allocation3], %s14
      %s17 = sshll.u32 [#allocation2], 4
      %s18 = int_to_ptr.vmem [resolvable:$true] %s17
      %20 = dma.hbm_to_vmem [thread:$0]  %s0, 16, %s18, [#allocation3]
    $region5: #{tpu_custom_call.1} parent=1 // pred_fallthru
      _
    // Predicated region
    $region6: #{tpu_custom_call.1} parent=1 // pred_check
      _
    $region7: #{tpu_custom_call.1} parent=1 // pred_check_branch
      %22 = sbr.rel (0) target = $region9
    $region8: #{tpu_custom_call.1} parent=1 // pred_region
      _
    $region9: #{tpu_custom_call.1} parent=1 // pred_fallthru
      _
    // Predicated region
    $region10: #{tpu_custom_call.1} parent=1 // pred_check
      _
    $region11: #{tpu_custom_call.1} parent=1 // pred_check_branch
      %24 = sbr.rel (0) target = $region13
    $region12: #{tpu_custom_call.1} parent=1 // pred_region
      %s26 = ssub.s32 1024, 1024
      %27 = vsyncadd [#allocation6], %s26
      %s28 = sshll.u32 [#allocation5], 4
      %s29 = int_to_ptr.vmem [resolvable:$true] %s28
      %34 = dma.hbm_to_vmem [thread:$0]  %s2, 1024, %s29, [#allocation6], 128, 128, 8
    $region13: #{tpu_custom_call.1} parent=1 // pred_fallthru
      _
    // Predicated region
    $region14: #{tpu_custom_call.1} parent=1 // pred_check
      _
    $region15: #{tpu_custom_call.1} parent=1 // pred_check_branch
      %36 = sbr.rel (0) target = $region17
    $region16: #{tpu_custom_call.1} parent=1 // pred_region
      %37 = dma.done [#allocation3], 16
    $region17: #{tpu_custom_call.1} parent=1 // pred_fallthru
      _
    // Predicated region
    $region18: #{tpu_custom_call.1} parent=1 // pred_check
      _
    $region19: #{tpu_custom_call.1} parent=1 // pred_check_branch
      %39 = sbr.rel (0) target = $region21
    $region20: #{tpu_custom_call.1} parent=1 // pred_region
      %40 = dma.done [#allocation6], 1024
    $region21: #{tpu_custom_call.1} parent=1 // pred_fallthru
      _
    %v41 = vld [vmem:[#allocation2] sm:$0x1]
    %v42 = vld [vmem:[%s1] sm:$0x1]
    %v43 = vlaneseq
    %v44 = vshrl.u32 %v43, 7
    %v45 = vadd.s32 %v44, 8
    %v46 = vadd.s32 %v44, 16
    %v47 = vadd.s32 %v44, 24
    %v48 = vadd.s32 %v44, 32
    %v49 = vadd.s32 %v44, 40
    %v50 = vadd.s32 %v44, 48
    %v51 = vadd.s32 %v44, 56
    %v52 = vadd.s32 %v44, 64
    %v53 = vadd.s32 %v44, 72
    %v54 = vadd.s32 %v44, 80
    %v55 = vadd.s32 %v44, 88
    %v56 = vlaneseq
    %v57 = vshrl.u32 %v56, 7
    %v58 = vsub.s32 0, %v57
    %v59 = vrot.slane %v41, %v58
    %vm60 = vcmp.eq.s32.totalorder %v44, %v59
    %vm61 = vcmp.eq.s32.totalorder %v45, %v59
    %vm62 = vcmp.eq.s32.totalorder %v46, %v59
    %vm63 = vcmp.eq.s32.totalorder %v47, %v59
    %vm64 = vcmp.eq.s32.totalorder %v48, %v59
    %vm65 = vcmp.eq.s32.totalorder %v49, %v59
    %vm66 = vcmp.eq.s32.totalorder %v50, %v59
    %vm67 = vcmp.eq.s32.totalorder %v51, %v59
    %vm68 = vcmp.eq.s32.totalorder %v52, %v59
    %vm69 = vcmp.eq.s32.totalorder %v53, %v59
    %vm70 = vcmp.eq.s32.totalorder %v54, %v59
    %vm71 = vcmp.eq.s32.totalorder %v55, %v59
    %v72 = vadd.s32 %v42, 50
    %v73 = vlaneseq
    %v74 = vshrl.u32 %v73, 7
    %v75 = vsub.s32 0, %v74
    %v76 = vrot.slane %v72, %v75
    %vm77 = vcmp.eq.s32.totalorder %v44, %v76
    %vm78 = vcmp.eq.s32.totalorder %v45, %v76
    %vm79 = vcmp.eq.s32.totalorder %v46, %v76
    %vm80 = vcmp.eq.s32.totalorder %v47, %v76
    %vm81 = vcmp.eq.s32.totalorder %v48, %v76
    %vm82 = vcmp.eq.s32.totalorder %v49, %v76
    %vm83 = vcmp.eq.s32.totalorder %v50, %v76
    %vm84 = vcmp.eq.s32.totalorder %v51, %v76
    %vm85 = vcmp.eq.s32.totalorder %v52, %v76
    %vm86 = vcmp.eq.s32.totalorder %v53, %v76
    %vm87 = vcmp.eq.s32.totalorder %v54, %v76
    %vm88 = vcmp.eq.s32.totalorder %v55, %v76
    %vm89 = vmor %vm60, %vm77
    %vm90 = vmor %vm61, %vm78
    %vm91 = vmor %vm62, %vm79
    %vm92 = vmor %vm63, %vm80
    %vm93 = vmor %vm64, %vm81
    %vm94 = vmor %vm65, %vm82
    %vm95 = vmor %vm66, %vm83
    %vm96 = vmor %vm67, %vm84
    %vm97 = vmor %vm68, %vm85
    %vm98 = vmor %vm69, %vm86
    %vm99 = vmor %vm70, %vm87
    %vm100 = vmor %vm71, %vm88
    %v101 = vsel %vm89, 1.0, 0.0
    %v102 = vsel %vm90, 1.0, 0.0
    %v103 = vsel %vm91, 1.0, 0.0
    %v104 = vsel %vm92, 1.0, 0.0
    %v105 = vsel %vm93, 1.0, 0.0
    %v106 = vsel %vm94, 1.0, 0.0
    %v107 = vsel %vm95, 1.0, 0.0
    %v108 = vsel %vm96, 1.0, 0.0
    %v109 = vsel %vm97, 1.0, 0.0
    %v110 = vsel %vm98, 1.0, 0.0
    %v111 = vsel %vm99, 1.0, 0.0
    %v112 = vsel %vm100, 1.0, 0.0
    %v113 = vld [vmem:[#allocation5] sm:$0xff]
    %v114 = vld [vmem:[#allocation5 + $0x8] sm:$0xff]
    %v115 = vld [vmem:[#allocation5 + $0x10] sm:$0xff]
    %v116 = vld [vmem:[#allocation5 + $0x18] sm:$0xff]
    %v117 = vld [vmem:[#allocation5 + $0x20] sm:$0xff]
    %v118 = vld [vmem:[#allocation5 + $0x28] sm:$0xff]
    %v119 = vld [vmem:[#allocation5 + $0x30] sm:$0xff]
    %v120 = vld [vmem:[#allocation5 + $0x38] sm:$0xff]
    %vm121 = vcmask 736256
    %v123 = vsel %vm121, %v113, 0
    %v126 = vsel %vm121, %v114, 0
    %v129 = vsel %vm121, %v115, 0
    %v132 = vsel %vm121, %v116, 0
    %v135 = vsel %vm121, %v117, 0
    %v138 = vsel %vm121, %v118, 0
    %v141 = vsel %vm121, %v119, 0
    %v144 = vsel %vm121, %v120, 0
    %vm146 = vcmask 1041408
    %v148 = vsel %vm146, %v112, 0
    %150 = vmatprep.subr.mxu0 0.0
    %151 = vmatpush1.msra.mxu0 %v101
    %152 = vmatprep.subr.mxu0 0.0
    %153 = vmatpush1.msra.mxu0 %v102
    %154 = vmatprep.subr.mxu0 0.0
    %155 = vmatpush1.msra.mxu0 %v103
    %156 = vmatprep.subr.mxu0 0.0
    %157 = vmatpush1.msra.mxu0 %v104
    %158 = vmatprep.subr.mxu0 0.0
    %159 = vmatpush1.msra.mxu0 %v105
    %160 = vmatprep.subr.mxu0 0.0
    %161 = vmatpush1.msra.mxu0 %v106
    %162 = vmatprep.subr.mxu0 0.0
    %163 = vmatpush1.msra.mxu0 %v107
    %164 = vmatprep.subr.mxu0 0.0
    %165 = vmatpush1.msra.mxu0 %v108
    %166 = vmatprep.subr.mxu0 0.0
    %167 = vmatpush1.msra.mxu0 %v109
    %168 = vmatprep.subr.mxu0 0.0
    %169 = vmatpush1.msra.mxu0 %v110
    %170 = vmatprep.subr.mxu0 0.0
    %171 = vmatpush1.msra.mxu0 %v111
    %172 = vmatprep.subr.mxu0 0.0
    %173 = vmatpush1.msra.mxu0 %v148
    %174 = vmatprep.subr.mxu0 0.0
    %175 = vmatpush1.msra.mxu0 0.0
    %176 = vmatprep.subr.mxu0 0.0
    %177 = vmatpush1.msra.mxu0 0.0
    %178 = vmatprep.subr.mxu0 0.0
    %179 = vmatpush1.msra.mxu0 0.0
    %180 = vmatprep.subr.mxu0 0.0
    %181 = vmatpush1.msra.mxu0 0.0
    %182 = vmatprep.subr.mxu0 0.0
    %183 = vmatpush1.msra.mxu0 0.0
    %184 = vmatprep.subr.mxu0 0.0
    %185 = vmatpush1.msra.mxu0 0.0
    %186 = vmatprep.subr.mxu0 0.0
    %187 = vmatpush1.msra.mxu0 0.0
    %188 = vmatprep.subr.mxu0 0.0
    %189 = vmatpush1.msra.mxu0 0.0
    %190 = vmatprep.subr.mxu0 0.0
    %191 = vmatpush1.msra.mxu0 0.0
    %192 = vmatprep.subr.mxu0 0.0
    %193 = vmatpush1.msra.mxu0 0.0
    %194 = vmatprep.subr.mxu0 0.0
    %195 = vmatpush1.msra.mxu0 0.0
    %196 = vmatprep.subr.mxu0 0.0
    %197 = vmatpush1.msra.mxu0 0.0
    %198 = vmatprep.subr.mxu0 0.0
    %199 = vmatpush1.msra.mxu0 0.0
    %200 = vmatprep.subr.mxu0 0.0
    %201 = vmatpush1.msra.mxu0 0.0
    %202 = vmatprep.subr.mxu0 0.0
    %203 = vmatpush1.msra.mxu0 0.0
    %204 = vmatprep.subr.mxu0 0.0
    %205 = vmatpush1.msra.mxu0 0.0
    %206 = vmatprep.subr.mxu0 0.0
    %207 = vmatpush1.msra.mxu0 0.0
    %208 = vmatprep.subr.mxu0 0.0
    %209 = vmatpush1.msra.mxu0 0.0
    %210 = vmatprep.subr.mxu0 0.0
    %211 = vmatpush1.msra.mxu0 0.0
    %212 = vmatprep.subr.mxu0 0.0
    %213 = vmatpush1.msra.mxu0 0.0
    %214 = vmatprep.mubr.f32.mxu0 0.0
    %215 = vmatmul.mubr.f32.gmra.mrb[0].mxu0 %v123
    %v216 = vpop.f32.mrb[0].mxu0
    %v217 = vadd.f32 0.0, %v216
    %v218 = vpop.f32.mrb[0].mxu0
    %219 = vmatprep.mubr.f32.mxu0 0.0
    %220 = vmatmul.mubr.f32.gmra.mrb[0].mxu0 %v126
    %v221 = vpop.f32.mrb[0].mxu0
    %v222 = vadd.f32 0.0, %v221
    %v223 = vpop.f32.mrb[0].mxu0
    %224 = vmatprep.mubr.f32.mxu0 0.0
    %225 = vmatmul.mubr.f32.gmra.mrb[0].mxu0 %v129
    %v226 = vpop.f32.mrb[0].mxu0
    %v227 = vadd.f32 0.0, %v226
    %v228 = vpop.f32.mrb[0].mxu0
    %229 = vmatprep.mubr.f32.mxu0 0.0
    %230 = vmatmul.mubr.f32.gmra.mrb[0].mxu0 %v132
    %v231 = vpop.f32.mrb[0].mxu0
    %v232 = vadd.f32 0.0, %v231
    %v233 = vpop.f32.mrb[0].mxu0
    %234 = vmatprep.mubr.f32.mxu0 0.0
    %235 = vmatmul.mubr.f32.gmra.mrb[0].mxu0 %v135
    %v236 = vpop.f32.mrb[0].mxu0
    %v237 = vadd.f32 0.0, %v236
    %v238 = vpop.f32.mrb[0].mxu0
    %239 = vmatprep.mubr.f32.mxu0 0.0
    %240 = vmatmul.mubr.f32.gmra.mrb[0].mxu0 %v138
    %v241 = vpop.f32.mrb[0].mxu0
    %v242 = vadd.f32 0.0, %v241
    %v243 = vpop.f32.mrb[0].mxu0
    %244 = vmatprep.mubr.f32.mxu0 0.0
    %245 = vmatmul.mubr.f32.gmra.mrb[0].mxu0 %v141
    %v246 = vpop.f32.mrb[0].mxu0
    %v247 = vadd.f32 0.0, %v246
    %v248 = vpop.f32.mrb[0].mxu0
    %249 = vmatprep.mubr.f32.mxu0 0.0
    %250 = vmatmul.mubr.f32.gmra.mrb[0].mxu0 %v144
    %v251 = vpop.f32.mrb[0].mxu0
    %v252 = vadd.f32 0.0, %v251
    %v253 = vpop.f32.mrb[0].mxu0
    %254 = vdwg.mxu0
    %v255 = vmul.f32 %v217, %v237
    %v256 = vmul.f32 %v222, %v242
    %v257 = vmul.f32 %v227, %v247
    %v258 = vmul.f32 %v232, %v252
    %v259 = vadd.f32 %v255, %v256
    %v260 = vadd.f32 %v259, %v257
    %v261 = vadd.f32 %v260, %v258
    %v262 = vrot.slane %v261, 4
    %v263 = vadd.f32 %v261, %v262
    %v264 = vrot.slane %v263, 2
    %v265 = vadd.f32 %v263, %v264
    %v266 = vrot.slane %v265, 1
    %v267 = vadd.f32 %v265, %v266
    %v268 = vsub.f32 0.0, %v267
    %vm269 = vcmask 1040384
    %v270 = vsel %vm269, %v268, %v267
    %v271 = vxor.u32 %v270, 2147483648
    %v272 = vmul.f32 %v271, 1.442695
    %v273 = vpow.pop %v272
    %v274 = vadd.f32 %v273, 1.0
    %v275 = vrcp.pop %v274
    %v276 = vmul.f32 1.0, %v275
    %277 = vst [vmem:[#allocation7] sm:$0x3] %v276
    // Predicated region
    $region22: #{tpu_custom_call.1} parent=1 // pred_check
      _
    $region23: #{tpu_custom_call.1} parent=1 // pred_check_branch
      %279 = sbr.rel (0) target = $region25
    $region24: #{tpu_custom_call.1} parent=1 // pred_region
      %s281 = ssub.s32 32, 32
      %282 = vsyncadd [#allocation4], %s281
      %s284 = sshll.u32 [#allocation7], 4
      %s285 = int_to_ptr.vmem [resolvable:$true] %s284
      %287 = dma.vmem_to_hbm [thread:$0]  %s285, 32, %s3, [#allocation4]
    $region25: #{tpu_custom_call.1} parent=1 // pred_fallthru
      _
    // Predicated region
    $region26: #{tpu_custom_call.1} parent=1 // pred_check
      _
    $region27: #{tpu_custom_call.1} parent=1 // pred_check_branch
      %289 = sbr.rel (0) target = $region29
    $region28: #{tpu_custom_call.1} parent=1 // pred_region
      %290 = dma.done [#allocation4], 32
    $region29: #{tpu_custom_call.1} parent=1 // pred_fallthru
      _
    %291 = vsyncpa [#allocation3], 1
    %292 = vsyncpa [#allocation6], 1
    %293 = vsyncpa [#allocation4], 1

</llo_original>
